<compile_context>
chip_gen: v7x
topology: tpu7x:2x2x1
jax: 0.10.0
libtpu: 0.0.40
codegen_flags: <defaults>
</compile_context>

<pallas_src>
import functools

import jax
import jax.numpy as jnp
from jax import lax
from jax.experimental import pallas as pl
from jax.experimental.pallas import tpu as pltpu

N_EMBED = 208      # n_embed from the module
BLOCK_SIZE = 256   # block_size from the module (tril buffer size; only [:T,:T] used)


def _head_kernel(x_ref, wqkv_ref, mask_ref, o_ref, *, head_size, qk_width):
    """One grid step processes a block of `bb` batch elements.

    x_ref    : (bb, T, C)        VMEM
    wqkv_ref : (C, 2*qk_width+H) VMEM, columns = [Wk.T(pad) | (scale*Wq).T(pad) | Wv.T]
    mask_ref : (T, T)            VMEM, resident causal multiply-mask (1.0 / 0.0)
    o_ref    : (bb, H, T)        VMEM, transposed (lane-dense) output
    """
    bb, t, c = x_ref.shape
    h = head_size
    w = qk_width
    cdt = x_ref.dtype  # MXU operand dtype (bf16 stays bf16; f32 stays f32)

    # Fused QKV projection: one (bb*T, C) @ (C, 2w+H) MXU matmul, f32 accumulate.
    x2d = x_ref[...].reshape(bb * t, c)
    qkv = jnp.dot(x2d, wqkv_ref[...], preferred_element_type=jnp.float32)

    # Tile-aligned views when qk_width == 128 (padded columns are zero and
    # contribute nothing to the q.k^T contraction).
    k = qkv[:, 0:w].reshape(bb, t, w).astype(cdt)
    q = qkv[:, w:2 * w].reshape(bb, t, w).astype(cdt)       # C**-0.5 folded into Wq
    v = qkv[:, 2 * w:2 * w + h].reshape(bb, t, h).astype(cdt)

    # Attention scores: contract on the head dim (no explicit k.T transpose).
    scores = lax.dot_general(
        q, k, (((2,), (2,)), ((0,), (0,))),
        preferred_element_type=jnp.float32)                 # (bb, Tq, Tk) f32

    # Row max over all columns is still a valid stabilizer; the causal mask is
    # applied as a single multiply after exp (resident VMEM mask, no iota/select).
    m = jnp.max(scores, axis=-1, keepdims=True)             # (bb, Tq, 1)
    p = jnp.exp(scores - m) * mask_ref[...][None, :, :]     # (bb, Tq, Tk), unnormalized
    denom = jnp.sum(p, axis=-1)                             # (bb, Tq)

    # Unnormalized PV matmul, TRANSPOSED: lane (last) dim is T -> lane-dense stores.
    out_t = lax.dot_general(
        v, p.astype(cdt), (((1,), (2,)), ((0,), (0,))),
        preferred_element_type=jnp.float32)                 # (bb, H, Tq) f32

    # Normalize AFTER the matmul: bb*H*T multiplies instead of bb*T*T.
    inv = pl.reciprocal(denom, approx=True)[:, None, :]     # (bb, 1, Tq), EUP slot
    o_ref[...] = (out_t * inv).astype(o_ref.dtype)

    # Dropout on attention weights is identity in eval mode.
    # TODO(synk): training-mode stochastic dropout (pltpu.prng_random_bits) omitted.


def _default_pad_qk():
    """Pad k/q weight sections to 128 lanes on chips with a 256-wide MXU (v6e/v7x).

    On v5e and older (128-wide MXU) the padding would add extra MXU passes, so skip.
    """
    try:
        kind = jax.devices()[0].device_kind.lower()
        return not any(s in kind for s in ("v2", "v3", "v4", "v5"))
    except Exception:  # pragma: no cover
        return True


def _pick_batch_block(batch, cap=16):
    """Largest divisor of `batch` (<= cap) leaving >= 2 grid steps, preferring an
    even grid so the v7x megacore splits the 'parallel' axis evenly."""
    cap = max(1, min(batch, cap))
    best, best_even = 1, None
    for d in range(1, cap + 1):
        if batch % d:
            continue
        g = batch // d
        if g < 2:
            continue
        best = max(best, d)
        if g % 2 == 0:
            best_even = d if best_even is None else max(best_even, d)
    return best_even if best_even is not None else best


def head_forward(x, w_key, w_query, w_value, *, batch_block=None, pad_qk=None):
    """x: (B, T, C); w_*: PyTorch-convention weights of shape (head_size, C)."""
    B, T, C = x.shape
    H = w_key.shape[0]
    assert C == N_EMBED and T <= BLOCK_SIZE

    if pad_qk is None:
        pad_qk = _default_pad_qk()
    qk_width = 128 if (pad_qk and H < 128) else H

    # Fold C**-0.5 into Wq, fuse + pre-transpose weights to (C, 2*qk_width + H),
    # zero-padding the k/q sections to a full 128-lane tile when enabled.
    scale = float(C) ** -0.5
    wk = w_key.T.astype(jnp.float32)                  # (C, H)
    wq = (w_query * scale).T.astype(jnp.float32)      # (C, H)
    if qk_width > H:
        zpad = jnp.zeros((C, qk_width - H), dtype=jnp.float32)
        wk = jnp.concatenate([wk, zpad], axis=1)
        wq = jnp.concatenate([wq, zpad], axis=1)
    w_qkv = jnp.concatenate([wk, wq, w_value.T.astype(jnp.float32)],
                            axis=1).astype(x.dtype)   # (C, 2*qk_width + H)

    # Resident causal multiply-mask (1.0 where col <= row, else 0.0).
    mask = jnp.tril(jnp.ones((T, T), dtype=jnp.float32))

    bb = batch_block if batch_block is not None else _pick_batch_block(B)
    assert B % bb == 0

    kernel = functools.partial(_head_kernel, head_size=H, qk_width=qk_width)

    out_t = pl.pallas_call(
        kernel,
        out_shape=jax.ShapeDtypeStruct((B, H, T), x.dtype),   # transposed, lane-dense
        grid_spec=pltpu.PrefetchScalarGridSpec(
            num_scalar_prefetch=0,
            grid=(B // bb,),
            in_specs=[
                pl.BlockSpec((bb, T, C), lambda b: (b, 0, 0)),
                pl.BlockSpec((C, 2 * qk_width + H), lambda b: (0, 0)),
                pl.BlockSpec((T, T), lambda b: (0, 0)),        # resident mask
            ],
            out_specs=pl.BlockSpec((bb, H, T), lambda b: (b, 0, 0)),
        ),
        compiler_params=pltpu.CompilerParams(
            dimension_semantics=("parallel",),
            vmem_limit_bytes=48 * 1024 * 1024,
        ),
    )(x, w_qkv, mask)

    # Back to the module's (B, T, H) layout with one XLA transpose.
    return jnp.swapaxes(out_t, 1, 2)


def head_reference(x, w_key, w_query, w_value):
    """Pure-JAX reference mirroring the PyTorch forward (eval mode), f32."""
    B, T, C = x.shape
    xf = x.astype(jnp.float32)
    k = xf @ w_key.T
    q = xf @ w_query.T
    v = xf @ w_value.T
    weights = (q @ jnp.swapaxes(k, -2, -1)) * (C ** -0.5)
    tril = jnp.tril(jnp.ones((T, T), dtype=bool))
    weights = jnp.where(tril, weights, -jnp.inf)
    weights = jax.nn.softmax(weights, axis=-1)
    return weights @ v


if __name__ == "__main__":
    key = jax.random.PRNGKey(0)
    kx, kk, kq, kv = jax.random.split(key, 4)

    B, T, C = 2, 8, N_EMBED
    head_size = 32

    x = jax.random.normal(kx, (B, T, C), dtype=jnp.float32)
    bound = 1.0 / (C ** 0.5)
    w_key_w = jax.random.uniform(kk, (head_size, C), jnp.float32, -bound, bound)
    w_query_w = jax.random.uniform(kq, (head_size, C), jnp.float32, -bound, bound)
    w_value_w = jax.random.uniform(kv, (head_size, C), jnp.float32, -bound, bound)

    ref = head_reference(x, w_key_w, w_query_w, w_value_w)

    # f32 path (tight check; slack only for the approx EUP reciprocal).
    out = jax.block_until_ready(head_forward(x, w_key_w, w_query_w, w_value_w))
    assert out.shape == (B, T, head_size)
    assert jnp.allclose(out, ref, atol=5e-3, rtol=5e-3), "f32 mismatch vs reference"

    # Larger sequence / multi-element batch blocks (exercises padded lanes + even grid).
    B2, T2 = 4, 128
    x2 = jax.random.normal(kx, (B2, T2, C), dtype=jnp.float32)
    ref2 = head_reference(x2, w_key_w, w_query_w, w_value_w)
    out2 = jax.block_until_ready(head_forward(x2, w_key_w, w_query_w, w_value_w))
    assert out2.shape == (B2, T2, head_size)
    assert jnp.allclose(out2, ref2, atol=5e-3, rtol=5e-3), "f32 (T=128) mismatch"

    # bf16 path (MXU operands in bf16, f32 accumulation) — loose check.
    out_bf16 = head_forward(x.astype(jnp.bfloat16), w_key_w, w_query_w, w_value_w)
    out_bf16 = jax.block_until_ready(out_bf16)
    assert out_bf16.shape == (B, T, head_size)
    assert bool(jnp.all(jnp.isfinite(out_bf16.astype(jnp.float32))))
    assert jnp.allclose(out_bf16.astype(jnp.float32), ref, atol=1e-1, rtol=1e-1), \
        "bf16 mismatch vs reference"

    print("KERNEL_OK")
</pallas_src>

<mosaic_0001>
module attributes {stable_mosaic.version = 11 : i64} {
  func.func @_head_kernel(%arg0: i32, %arg1: memref<1x8x208xf32, #tpu.memory_space<vmem>>, %arg2: memref<208x288xf32, #tpu.memory_space<vmem>>, %arg3: memref<8x8xf32, #tpu.memory_space<vmem>>, %arg4: memref<1x32x8xf32, #tpu.memory_space<vmem>>) attributes {dimension_semantics = [#tpu.dimension_semantics<parallel>], iteration_bounds = array<i64: 2>, scalar_prefetch = 0 : i64, scratch_operands = 0 : i64, tpu.core_type = #tpu.core_type<tc>, window_params = [{transform_indices = @transform_0, window_bounds = array<i64: 1, 8, 208>}, {pipeline_mode = #tpu.pipeline_mode<synchronous>, transform_indices = @transform_1, window_bounds = array<i64: 208, 288>}, {pipeline_mode = #tpu.pipeline_mode<synchronous>, transform_indices = @transform_2, window_bounds = array<i64: 8, 8>}, {transform_indices = @transform_3, window_bounds = array<i64: 1, 32, 8>}]} {
    %c0 = arith.constant 0 : index
    %c0_0 = arith.constant 0 : index
    %c0_1 = arith.constant 0 : index
    %0 = vector.load %arg1[%c0, %c0_0, %c0_1] : memref<1x8x208xf32, #tpu.memory_space<vmem>>, vector<1x8x208xf32>
    %1 = vector.shape_cast %0 : vector<1x8x208xf32> to vector<8x208xf32>
    %c0_2 = arith.constant 0 : index
    %c0_3 = arith.constant 0 : index
    %2 = vector.load %arg2[%c0_2, %c0_3] : memref<208x288xf32, #tpu.memory_space<vmem>>, vector<208x288xf32>
    %cst = arith.constant dense<0.000000e+00> : vector<8x288xf32>
    %3 = tpu.matmul %1, %2, %cst {dimension_numbers = #tpu.dot_dimension_numbers<[1], [0], [0], [1], [0, 0, 1, 1], [], []>} : vector<8x208xf32>, vector<208x288xf32>, vector<8x288xf32> -> vector<8x288xf32>
    %4 = vector.extract_strided_slice %3 {offsets = [0, 0], sizes = [8, 128], strides = [1, 1]} : vector<8x288xf32> to vector<8x128xf32>
    %5 = vector.shape_cast %4 : vector<8x128xf32> to vector<1x8x128xf32>
    %6 = vector.extract_strided_slice %3 {offsets = [0, 128], sizes = [8, 128], strides = [1, 1]} : vector<8x288xf32> to vector<8x128xf32>
    %7 = vector.shape_cast %6 : vector<8x128xf32> to vector<1x8x128xf32>
    %8 = vector.extract_strided_slice %3 {offsets = [0, 256], sizes = [8, 32], strides = [1, 1]} : vector<8x288xf32> to vector<8x32xf32>
    %9 = vector.shape_cast %8 : vector<8x32xf32> to vector<1x8x32xf32>
    %cst_4 = arith.constant dense<0.000000e+00> : vector<1x8x8xf32>
    %10 = tpu.matmul %7, %5, %cst_4 {dimension_numbers = #tpu.dot_dimension_numbers<[2], [2], [1], [1], [0, 0, 0, 1, 1, 1], [0], [0]>} : vector<1x8x128xf32>, vector<1x8x128xf32>, vector<1x8x8xf32> -> vector<1x8x8xf32>
    %cst_5 = arith.constant dense<0xFF800000> : vector<1x8xf32>
    %11 = vector.multi_reduction <maximumf>, %10, %cst_5 [2] : vector<1x8x8xf32> to vector<1x8xf32>
    %12 = vector.shape_cast %11 : vector<1x8xf32> to vector<1x8x1xf32>
    %13 = vector.broadcast %12 : vector<1x8x1xf32> to vector<1x8x8xf32>
    %14 = arith.subf %10, %13 : vector<1x8x8xf32>
    %15 = math.exp %14 : vector<1x8x8xf32>
    %c0_6 = arith.constant 0 : index
    %c0_7 = arith.constant 0 : index
    %16 = vector.load %arg3[%c0_6, %c0_7] : memref<8x8xf32, #tpu.memory_space<vmem>>, vector<8x8xf32>
    %17 = vector.shape_cast %16 : vector<8x8xf32> to vector<1x8x8xf32>
    %18 = arith.mulf %15, %17 : vector<1x8x8xf32>
    %cst_8 = arith.constant dense<0.000000e+00> : vector<1x8xf32>
    %19 = vector.multi_reduction <add>, %18, %cst_8 [2] : vector<1x8x8xf32> to vector<1x8xf32>
    %cst_9 = arith.constant dense<0.000000e+00> : vector<1x32x8xf32>
    %20 = tpu.matmul %9, %18, %cst_9 {dimension_numbers = #tpu.dot_dimension_numbers<[1], [2], [2], [1], [0, 0, 0, 2, 1, 1], [0], [0]>} : vector<1x8x32xf32>, vector<1x8x8xf32>, vector<1x32x8xf32> -> vector<1x32x8xf32>
    %21 = tpu.reciprocal %19 {approx = true} : vector<1x8xf32> -> vector<1x8xf32>
    %22 = vector.shape_cast %21 : vector<1x8xf32> to vector<1x1x8xf32>
    %23 = vector.broadcast %22 : vector<1x1x8xf32> to vector<1x32x8xf32>
    %24 = arith.mulf %20, %23 : vector<1x32x8xf32>
    %c0_10 = arith.constant 0 : index
    %c0_11 = arith.constant 0 : index
    %c0_12 = arith.constant 0 : index
    %25 = vector.load %arg4[%c0_10, %c0_11, %c0_12] : memref<1x32x8xf32, #tpu.memory_space<vmem>>, vector<1x32x8xf32>
    tpu.vector_store %arg4[%c0_10, %c0_11, %c0_12], %24 {strides = array<i32>} : memref<1x32x8xf32, #tpu.memory_space<vmem>>, vector<1x32x8xf32>,
    return
  }
  func.func @transform_0(%arg0: i32) -> (i32, i32, i32) {
    %c0_i32 = arith.constant 0 : i32
    %c0_i32_0 = arith.constant 0 : i32
    %c0_i32_1 = arith.constant 0 : i32
    return %arg0, %c0_i32, %c0_i32_0 : i32, i32, i32
  }
  func.func @transform_1(%arg0: i32) -> (i32, i32) {
    %c0_i32 = arith.constant 0 : i32
    %c0_i32_0 = arith.constant 0 : i32
    %c0_i32_1 = arith.constant 0 : i32
    return %c0_i32, %c0_i32_0 : i32, i32
  }
  func.func @transform_2(%arg0: i32) -> (i32, i32) {
    %c0_i32 = arith.constant 0 : i32
    %c0_i32_0 = arith.constant 0 : i32
    %c0_i32_1 = arith.constant 0 : i32
    return %c0_i32, %c0_i32_0 : i32, i32
  }
  func.func @transform_3(%arg0: i32) -> (i32, i32, i32) {
    %c0_i32 = arith.constant 0 : i32
    %c0_i32_0 = arith.constant 0 : i32
    %c0_i32_1 = arith.constant 0 : i32
    return %arg0, %c0_i32, %c0_i32_0 : i32, i32, i32
  }
}

</mosaic_0001>

<llo_original>
// kernel: tpu_custom_call.1
$region0: #{tpu_custom_call.1}
  #allocation0 [shape = 'u32[]', space=smem, size = 0x4, offset = 0x4, fixed_abs, tag = 'smem constant byte address 0x4 - core index']
  #allocation1 [shape = 'u32[144,128]{1,0:T(1,128)}', space=vmem, size = 0x12000, scoped, tag = 'internal scratch']
  %s0 = inlined_call_operand.vmem [shape: f32[2,8,208], index: 0, kind: input, shape index: {}]
  %s1 = inlined_call_operand.vmem [shape: f32[208,288], index: 1, kind: input, shape index: {}]
  %s2 = inlined_call_operand.vmem [shape: f32[8,8], index: 2, kind: input, shape index: {}]
  %s3 = inlined_call_operand.vmem [shape: f32[2,32,8], index: 3, kind: output, shape index: {}]
  %s4 = sld [smem:[#allocation0]]
  $region45: #{tpu_custom_call.1} parent=0
    _
  %s6 = ssub.s32 1, %s4
  %s7 = scalar_select 0, %s6, %s4
  loop: start=0, step=1, limit=4
  $region2: #{tpu_custom_call.1} parent=0 // loop_pre_header
    _
  $region3: #{tpu_custom_call.1} parent=0 // loop_header
    %s9 = sphi 0, %s13
    %p10 = scmp.ge.s32.totalorder %s9, 4
    %s19 = sphi 0, %s21
    %s22 = sphi 0, %s19
    %s23 = sphi 0, %s22
    %s39 = sphi 0, %s23
    %s43 = sphi 0, %s43
    %s45 = sphi 0, %s43
    %s46 = sphi 0, %s45
    %s60 = sphi 0, %s46
    %s64 = sphi 0, %s64
    %s66 = sphi 0, %s64
    %s67 = sphi 0, %s66
    %s81 = sphi 0, %s67
    %s87 = sphi 0, %s89
    %s90 = sphi 0, %s87
    %s91 = sphi 0, %s90
    %s107 = sphi 0, %s91
  $region4: #{tpu_custom_call.1} parent=0 // loop_header_branch
    %12 = sbr.rel (%p10) target = $region8
  $region5: #{tpu_custom_call.1} parent=0 // loop_body
    %s14 = ssub.s32 %s9, 1
    %s15 = ssub.s32 %s9, 2
    %s16 = sadd.s32 %s9, 1
    %s17 = ssub.s32 %s9, %s16
    %p18 = scmp.eq.s32.totalorder %s17, 0
    %s20 = sadd.s32 %s19, 1
    %s21 = scalar_select %p18, %s19, %s20
    %p24 = pneg %p18
    %p25 = scmp.eq.s32.totalorder %s9, 1
    %p26 = por %p24, %p25
    %p27 = scmp.ne.s32.totalorder %s19, %s22
    %p28 = scmp.eq.s32.totalorder %s9, 0
    %p29 = por %p27, %p28
    %p30 = scmp.ne.s32.totalorder %s19, %s22
    %p31 = scmp.eq.s32.totalorder %s14, 1
    %p32 = por %p30, %p31
    %p33 = scmp.ne.s32.totalorder %s22, %s23
    %p34 = scmp.eq.s32.totalorder %s14, 0
    %p35 = por %p33, %p34
    %p36 = scmp.ne.s32.totalorder %s22, %s23
    %p37 = scmp.eq.s32.totalorder %s15, 1
    %p38 = por %p36, %p37
    %p40 = scmp.ne.s32.totalorder %s23, %s39
    %p41 = scmp.eq.s32.totalorder %s15, 0
    %p42 = por %p40, %p41
    %s44 = sadd.s32 %s43, 1
    %p47 = scmp.eq.s32.totalorder %s9, 1
    %p48 = scmp.ne.s32.totalorder %s43, %s45
    %p49 = scmp.eq.s32.totalorder %s9, 0
    %p50 = por %p48, %p49
    %p51 = scmp.ne.s32.totalorder %s43, %s45
    %p52 = scmp.eq.s32.totalorder %s14, 1
    %p53 = por %p51, %p52
    %p54 = scmp.ne.s32.totalorder %s45, %s46
    %p55 = scmp.eq.s32.totalorder %s14, 0
    %p56 = por %p54, %p55
    %p57 = scmp.ne.s32.totalorder %s45, %s46
    %p58 = scmp.eq.s32.totalorder %s15, 1
    %p59 = por %p57, %p58
    %p61 = scmp.ne.s32.totalorder %s46, %s60
    %p62 = scmp.eq.s32.totalorder %s15, 0
    %p63 = por %p61, %p62
    %s65 = sadd.s32 %s64, 1
    %p68 = scmp.eq.s32.totalorder %s9, 1
    %p69 = scmp.ne.s32.totalorder %s64, %s66
    %p70 = scmp.eq.s32.totalorder %s9, 0
    %p71 = por %p69, %p70
    %p72 = scmp.ne.s32.totalorder %s64, %s66
    %p73 = scmp.eq.s32.totalorder %s14, 1
    %p74 = por %p72, %p73
    %p75 = scmp.ne.s32.totalorder %s66, %s67
    %p76 = scmp.eq.s32.totalorder %s14, 0
    %p77 = por %p75, %p76
    %p78 = scmp.ne.s32.totalorder %s66, %s67
    %p79 = scmp.eq.s32.totalorder %s15, 1
    %p80 = por %p78, %p79
    %p82 = scmp.ne.s32.totalorder %s67, %s81
    %p83 = scmp.eq.s32.totalorder %s15, 0
    %p84 = por %p82, %p83
    %s85 = ssub.s32 %s9, %s16
    %p86 = scmp.eq.s32.totalorder %s85, 0
    %s88 = sadd.s32 %s87, 1
    %s89 = scalar_select %p86, %s87, %s88
    %p92 = pneg %p86
    %p93 = scmp.eq.s32.totalorder %s9, 1
    %p94 = por %p92, %p93
    %p95 = scmp.ne.s32.totalorder %s87, %s90
    %p96 = scmp.eq.s32.totalorder %s9, 0
    %p97 = por %p95, %p96
    %p98 = scmp.ne.s32.totalorder %s87, %s90
    %p99 = scmp.eq.s32.totalorder %s14, 1
    %p100 = por %p98, %p99
    %p101 = scmp.ne.s32.totalorder %s90, %s91
    %p102 = scmp.eq.s32.totalorder %s14, 0
    %p103 = por %p101, %p102
    %p104 = scmp.ne.s32.totalorder %s90, %s91
    %p105 = scmp.eq.s32.totalorder %s15, 1
    %p106 = por %p104, %p105
    %p108 = scmp.ne.s32.totalorder %s91, %s107
    %p109 = scmp.eq.s32.totalorder %s15, 0
    %p110 = por %p108, %p109
    %p111 = scmp.le.s32.totalorder 1, %s9
    %p112 = scmp.lt.s32.totalorder %s9, 3
    %p113 = pnand %p111, %p112
    %p114 = pneg %p113
    // Predicated region
    $region9: #{tpu_custom_call.1} parent=5 // pred_check
      _
    $region10: #{tpu_custom_call.1} parent=5 // pred_check_branch
      %116 = sbr.rel (%p113) target = $region12
    $region11: #{tpu_custom_call.1} parent=5 // pred_region
      %s117 = ssub.s32 %s9, 1
      // Predicated region
      $region13: #{tpu_custom_call.1} parent=11 // pred_check
        %p118 = pneg %p56
      $region14: #{tpu_custom_call.1} parent=11 // pred_check_branch
        %120 = sbr.rel (%p118) target = $region16
      $region15: #{tpu_custom_call.1} parent=11 // pred_region
        _
      $region16: #{tpu_custom_call.1} parent=11 // pred_fallthru
        _
      // Predicated region
      $region17: #{tpu_custom_call.1} parent=11 // pred_check
        %p121 = pneg %p77
      $region18: #{tpu_custom_call.1} parent=11 // pred_check_branch
        %123 = sbr.rel (%p121) target = $region20
      $region19: #{tpu_custom_call.1} parent=11 // pred_region
        _
      $region20: #{tpu_custom_call.1} parent=11 // pred_fallthru
        _
    $region12: #{tpu_custom_call.1} parent=5 // pred_fallthru
      _
    %p124 = scmp.lt.s32.totalorder %s9, 2
    // Predicated region
    $region21: #{tpu_custom_call.1} parent=5 // pred_check
      %p125 = pneg %p124
    $region22: #{tpu_custom_call.1} parent=5 // pred_check_branch
      %127 = sbr.rel (%p125) target = $region24
    $region23: #{tpu_custom_call.1} parent=5 // pred_region
      // Predicated region
      $region25: #{tpu_custom_call.1} parent=23 // pred_check
        %p128 = pneg %p29
      $region26: #{tpu_custom_call.1} parent=23 // pred_check_branch
        %130 = sbr.rel (%p128) target = $region28
      $region27: #{tpu_custom_call.1} parent=23 // pred_region
        %p131 = scmp.lt.s32.totalorder %s9, 1
        %s132 = scalar_select %p131, %s9, 1
        %s133 = smul.addr %s132, 2
        %s134 = smul.addr %s133, 8
        %s135 = scalar_lea.vmem %s0, %s134
      $region28: #{tpu_custom_call.1} parent=23 // pred_fallthru
        _
    $region24: #{tpu_custom_call.1} parent=5 // pred_fallthru
      _
    %p136 = scmp.le.s32.totalorder 1, %s9
    %p137 = scmp.lt.s32.totalorder %s9, 3
    %p138 = pnand %p136, %p137
    %p139 = pneg %p138
    // Predicated region
    $region29: #{tpu_custom_call.1} parent=5 // pred_check
      _
    $region30: #{tpu_custom_call.1} parent=5 // pred_check_branch
      %141 = sbr.rel (%p138) target = $region32
    $region31: #{tpu_custom_call.1} parent=5 // pred_region
      %s142 = ssub.s32 %s9, 1
      %p143 = scmp.lt.s32.totalorder %s14, 1
      %s144 = scalar_select %p143, %s14, 1
      %s145 = smul.addr %s144, 2
      %s146 = smul.addr %s145, 8
      %s147 = scalar_lea.vmem %s0, %s146
      %p148 = pneg %p35
      %p149 = pneg %p32
      %p150 = pneg %p56
      %p151 = pneg %p53
      %p152 = pneg %p77
      %p153 = pneg %p74
      %p154 = pneg %p103
      %p155 = pneg %p100
      %p156 = scmp.lt.s32.totalorder %s14, 1
      %s157 = scalar_select %p156, %s14, 1
      %s158 = smul.addr %s157, 4
      %s159 = smul.addr %s158, 8
      %s160 = scalar_lea.vmem %s3, %s159
      %p161 = scmp.lt.s32.totalorder %s14, 1
      %s162 = scalar_select %p161, %s14, 1
      %s163 = smul.addr %s162, 2
      %s164 = smul.addr %s163, 8
      %s165 = scalar_lea.vmem %s0, %s164
      %p166 = scmp.lt.s32.totalorder %s14, 1
      %s167 = scalar_select %p166, %s14, 1
      %s168 = smul.addr %s167, 4
      %s169 = smul.addr %s168, 8
      %s170 = scalar_lea.vmem %s3, %s169
      %v171 = vld [vmem:[%s165] sm:$0xff]
      %v172 = vld [vmem:[%s165 + $0x8] sm:$0xff]
      %v173 = vld [vmem:[%s1] sm:$0xff]
      %v174 = vld [vmem:[%s1 + $0x8] sm:$0xff]
      %v175 = vld [vmem:[%s1 + $0x10] sm:$0xff]
      %v176 = vld [vmem:[%s1 + $0x18] sm:$0xff]
      %v177 = vld [vmem:[%s1 + $0x20] sm:$0xff]
      %v178 = vld [vmem:[%s1 + $0x28] sm:$0xff]
      %v179 = vld [vmem:[%s1 + $0x30] sm:$0xff]
      %v180 = vld [vmem:[%s1 + $0x38] sm:$0xff]
      %v181 = vld [vmem:[%s1 + $0x40] sm:$0xff]
      %v182 = vld [vmem:[%s1 + $0x48] sm:$0xff]
      %v183 = vld [vmem:[%s1 + $0x50] sm:$0xff]
      %v184 = vld [vmem:[%s1 + $0x58] sm:$0xff]
      %v185 = vld [vmem:[%s1 + $0x60] sm:$0xff]
      %v186 = vld [vmem:[%s1 + $0x68] sm:$0xff]
      %v187 = vld [vmem:[%s1 + $0x70] sm:$0xff]
      %v188 = vld [vmem:[%s1 + $0x78] sm:$0xff]
      %v189 = vld [vmem:[%s1 + $0x80] sm:$0xff]
      %v190 = vld [vmem:[%s1 + $0x88] sm:$0xff]
      %v191 = vld [vmem:[%s1 + $0x90] sm:$0xff]
      %v192 = vld [vmem:[%s1 + $0x98] sm:$0xff]
      %v193 = vld [vmem:[%s1 + $0xa0] sm:$0xff]
      %v194 = vld [vmem:[%s1 + $0xa8] sm:$0xff]
      %v195 = vld [vmem:[%s1 + $0xb0] sm:$0xff]
      %v196 = vld [vmem:[%s1 + $0xb8] sm:$0xff]
      %v197 = vld [vmem:[%s1 + $0xc0] sm:$0xff]
      %v198 = vld [vmem:[%s1 + $0xc8] sm:$0xff]
      %v199 = vld [vmem:[%s1 + $0xd0] sm:$0xff]
      %v200 = vld [vmem:[%s1 + $0xd8] sm:$0xff]
      %v201 = vld [vmem:[%s1 + $0xe0] sm:$0xff]
      %v202 = vld [vmem:[%s1 + $0xe8] sm:$0xff]
      %v203 = vld [vmem:[%s1 + $0xf0] sm:$0xff]
      %v204 = vld [vmem:[%s1 + $0xf8] sm:$0xff]
      %v205 = vld [vmem:[%s1 + $0x100] sm:$0xff]
      %v206 = vld [vmem:[%s1 + $0x108] sm:$0xff]
      %v207 = vld [vmem:[%s1 + $0x110] sm:$0xff]
      %v208 = vld [vmem:[%s1 + $0x118] sm:$0xff]
      %v209 = vld [vmem:[%s1 + $0x120] sm:$0xff]
      %v210 = vld [vmem:[%s1 + $0x128] sm:$0xff]
      %v211 = vld [vmem:[%s1 + $0x130] sm:$0xff]
      %v212 = vld [vmem:[%s1 + $0x138] sm:$0xff]
      %v213 = vld [vmem:[%s1 + $0x140] sm:$0xff]
      %v214 = vld [vmem:[%s1 + $0x148] sm:$0xff]
      %v215 = vld [vmem:[%s1 + $0x150] sm:$0xff]
      %v216 = vld [vmem:[%s1 + $0x158] sm:$0xff]
      %v217 = vld [vmem:[%s1 + $0x160] sm:$0xff]
      %v218 = vld [vmem:[%s1 + $0x168] sm:$0xff]
      %v219 = vld [vmem:[%s1 + $0x170] sm:$0xff]
      %v220 = vld [vmem:[%s1 + $0x178] sm:$0xff]
      %v221 = vld [vmem:[%s1 + $0x180] sm:$0xff]
      %v222 = vld [vmem:[%s1 + $0x188] sm:$0xff]
      %v223 = vld [vmem:[%s1 + $0x190] sm:$0xff]
      %v224 = vld [vmem:[%s1 + $0x198] sm:$0xff]
      %v225 = vld [vmem:[%s1 + $0x1a0] sm:$0xff]
      %v226 = vld [vmem:[%s1 + $0x1a8] sm:$0xff]
      %v227 = vld [vmem:[%s1 + $0x1b0] sm:$0xff]
      %v228 = vld [vmem:[%s1 + $0x1b8] sm:$0xff]
      %v229 = vld [vmem:[%s1 + $0x1c0] sm:$0xff]
      %v230 = vld [vmem:[%s1 + $0x1c8] sm:$0xff]
      %v231 = vld [vmem:[%s1 + $0x1d0] sm:$0xff]
      %v232 = vld [vmem:[%s1 + $0x1d8] sm:$0xff]
      %v233 = vld [vmem:[%s1 + $0x1e0] sm:$0xff]
      %v234 = vld [vmem:[%s1 + $0x1e8] sm:$0xff]
      %v235 = vld [vmem:[%s1 + $0x1f0] sm:$0xff]
      %v236 = vld [vmem:[%s1 + $0x1f8] sm:$0xff]
      %v237 = vld [vmem:[%s1 + $0x200] sm:$0xff]
      %v238 = vld [vmem:[%s1 + $0x208] sm:$0xff]
      %v239 = vld [vmem:[%s1 + $0x210] sm:$0xff]
      %v240 = vld [vmem:[%s1 + $0x218] sm:$0xff]
      %v241 = vld [vmem:[%s1 + $0x220] sm:$0xff]
      %v242 = vld [vmem:[%s1 + $0x228] sm:$0xff]
      %v243 = vld [vmem:[%s1 + $0x230] sm:$0xff]
      %v244 = vld [vmem:[%s1 + $0x238] sm:$0xff]
      %v245 = vld [vmem:[%s1 + $0x240] sm:$0xff]
      %v246 = vld [vmem:[%s1 + $0x248] sm:$0xff]
      %v247 = vld [vmem:[%s1 + $0x250] sm:$0xff]
      %v248 = vld [vmem:[%s1 + $0x258] sm:$0xff]
      %v249 = vld [vmem:[%s1 + $0x260] sm:$0xff]
      %v250 = vld [vmem:[%s1 + $0x268] sm:$0xff]
      %vm251 = vcmask 654336
      %v253 = vsel %vm251, %v172, 0
      %255 = vmatprep.subr.mxu0 %v174
      %256 = vmatpush1.msra.mxu0 %v173
      %257 = vmatprep.subr.mxu0 %v177
      %258 = vmatpush1.msra.mxu0 %v176
      %259 = vmatprep.subr.mxu0 %v180
      %260 = vmatpush1.msra.mxu0 %v179
      %261 = vmatprep.subr.mxu0 %v183
      %262 = vmatpush1.msra.mxu0 %v182
      %263 = vmatprep.subr.mxu0 %v186
      %264 = vmatpush1.msra.mxu0 %v185
      %265 = vmatprep.subr.mxu0 %v189
      %266 = vmatpush1.msra.mxu0 %v188
      %267 = vmatprep.subr.mxu0 %v192
      %268 = vmatpush1.msra.mxu0 %v191
      %269 = vmatprep.subr.mxu0 %v195
      %270 = vmatpush1.msra.mxu0 %v194
      %271 = vmatprep.subr.mxu0 %v198
      %272 = vmatpush1.msra.mxu0 %v197
      %273 = vmatprep.subr.mxu0 %v201
      %274 = vmatpush1.msra.mxu0 %v200
      %275 = vmatprep.subr.mxu0 %v204
      %276 = vmatpush1.msra.mxu0 %v203
      %277 = vmatprep.subr.mxu0 %v207
      %278 = vmatpush1.msra.mxu0 %v206
      %279 = vmatprep.subr.mxu0 %v210
      %280 = vmatpush1.msra.mxu0 %v209
      %281 = vmatprep.subr.mxu0 %v213
      %282 = vmatpush1.msra.mxu0 %v212
      %283 = vmatprep.subr.mxu0 %v216
      %284 = vmatpush1.msra.mxu0 %v215
      %285 = vmatprep.subr.mxu0 %v219
      %286 = vmatpush1.msra.mxu0 %v218
      %287 = vmatprep.subr.mxu0 %v222
      %288 = vmatpush1.msra.mxu0 %v221
      %289 = vmatprep.subr.mxu0 %v225
      %290 = vmatpush1.msra.mxu0 %v224
      %291 = vmatprep.subr.mxu0 %v228
      %292 = vmatpush1.msra.mxu0 %v227
      %293 = vmatprep.subr.mxu0 %v231
      %294 = vmatpush1.msra.mxu0 %v230
      %295 = vmatprep.subr.mxu0 %v234
      %296 = vmatpush1.msra.mxu0 %v233
      %297 = vmatprep.subr.mxu0 %v237
      %298 = vmatpush1.msra.mxu0 %v236
      %299 = vmatprep.subr.mxu0 %v240
      %300 = vmatpush1.msra.mxu0 %v239
      %301 = vmatprep.subr.mxu0 %v243
      %302 = vmatpush1.msra.mxu0 %v242
      %303 = vmatprep.subr.mxu0 %v246
      %304 = vmatpush1.msra.mxu0 %v245
      %305 = vmatprep.subr.mxu0 %v249
      %306 = vmatpush1.msra.mxu0 %v248
      %307 = vmatprep.subr.mxu0 0.0
      %308 = vmatpush1.msra.mxu0 0.0
      %309 = vmatprep.subr.mxu0 0.0
      %310 = vmatpush1.msra.mxu0 0.0
      %311 = vmatprep.subr.mxu0 0.0
      %312 = vmatpush1.msra.mxu0 0.0
      %313 = vmatprep.subr.mxu0 0.0
      %314 = vmatpush1.msra.mxu0 0.0
      %315 = vmatprep.subr.mxu0 0.0
      %316 = vmatpush1.msra.mxu0 0.0
      %317 = vmatprep.subr.mxu0 0.0
      %318 = vmatpush1.msra.mxu0 0.0
      %319 = vmatprep.mubr.f32.mxu0 %v253
      %320 = vmatmul.mubr.f32.gmra.mrb[0].mxu0 %v171
      %v321 = vpop.f32.mrb[0].mxu0
      %v322 = vadd.f32 0.0, %v321
      %v323 = vpop.f32.mrb[0].mxu0
      %v324 = vadd.f32 0.0, %v323
      %325 = vdwg.mxu0
      %326 = vmatprep.subr.mxu0 0.0
      %327 = vmatpush1.msra.mxu0 %v175
      %328 = vmatprep.subr.mxu0 0.0
      %329 = vmatpush1.msra.mxu0 %v178
      %330 = vmatprep.subr.mxu0 0.0
      %331 = vmatpush1.msra.mxu0 %v181
      %332 = vmatprep.subr.mxu0 0.0
      %333 = vmatpush1.msra.mxu0 %v184
      %334 = vmatprep.subr.mxu0 0.0
      %335 = vmatpush1.msra.mxu0 %v187
      %336 = vmatprep.subr.mxu0 0.0
      %337 = vmatpush1.msra.mxu0 %v190
      %338 = vmatprep.subr.mxu0 0.0
      %339 = vmatpush1.msra.mxu0 %v193
      %340 = vmatprep.subr.mxu0 0.0
      %341 = vmatpush1.msra.mxu0 %v196
      %342 = vmatprep.subr.mxu0 0.0
      %343 = vmatpush1.msra.mxu0 %v199
      %344 = vmatprep.subr.mxu0 0.0
      %345 = vmatpush1.msra.mxu0 %v202
      %346 = vmatprep.subr.mxu0 0.0
      %347 = vmatpush1.msra.mxu0 %v205
      %348 = vmatprep.subr.mxu0 0.0
      %349 = vmatpush1.msra.mxu0 %v208
      %350 = vmatprep.subr.mxu0 0.0
      %351 = vmatpush1.msra.mxu0 %v211
      %352 = vmatprep.subr.mxu0 0.0
      %353 = vmatpush1.msra.mxu0 %v214
      %354 = vmatprep.subr.mxu0 0.0
      %355 = vmatpush1.msra.mxu0 %v217
      %356 = vmatprep.subr.mxu0 0.0
      %357 = vmatpush1.msra.mxu0 %v220
      %358 = vmatprep.subr.mxu0 0.0
      %359 = vmatpush1.msra.mxu0 %v223
      %360 = vmatprep.subr.mxu0 0.0
      %361 = vmatpush1.msra.mxu0 %v226
      %362 = vmatprep.subr.mxu0 0.0
      %363 = vmatpush1.msra.mxu0 %v229
      %364 = vmatprep.subr.mxu0 0.0
      %365 = vmatpush1.msra.mxu0 %v232
      %366 = vmatprep.subr.mxu0 0.0
      %367 = vmatpush1.msra.mxu0 %v235
      %368 = vmatprep.subr.mxu0 0.0
      %369 = vmatpush1.msra.mxu0 %v238
      %370 = vmatprep.subr.mxu0 0.0
      %371 = vmatpush1.msra.mxu0 %v241
      %372 = vmatprep.subr.mxu0 0.0
      %373 = vmatpush1.msra.mxu0 %v244
      %374 = vmatprep.subr.mxu0 0.0
      %375 = vmatpush1.msra.mxu0 %v247
      %376 = vmatprep.subr.mxu0 0.0
      %377 = vmatpush1.msra.mxu0 %v250
      %378 = vmatprep.subr.mxu0 0.0
      %379 = vmatpush1.msra.mxu0 0.0
      %380 = vmatprep.subr.mxu0 0.0
      %381 = vmatpush1.msra.mxu0 0.0
      %382 = vmatprep.subr.mxu0 0.0
      %383 = vmatpush1.msra.mxu0 0.0
      %384 = vmatprep.subr.mxu0 0.0
      %385 = vmatpush1.msra.mxu0 0.0
      %386 = vmatprep.subr.mxu0 0.0
      %387 = vmatpush1.msra.mxu0 0.0
      %388 = vmatprep.subr.mxu0 0.0
      %389 = vmatpush1.msra.mxu0 0.0
      %390 = vmatprep.mubr.f32.mxu0 %v253
      %391 = vmatmul.mubr.f32.gmra.mrb[0].mxu0 %v171
      %v392 = vpop.f32.mrb[0].mxu0
      %v393 = vadd.f32 0.0, %v392
      %v394 = vpop.f32.mrb[0].mxu0
      %395 = vdwg.mxu0
      %396 = vmatprep.subr.mxu0 0.0
      %397 = vmatpush1.xpose.msra.mxu0 %v322
      %398 = vmatprep.subr.mxu0 0.0
      %399 = vmatpush1.xpose.msra.mxu0 0.0
      %400 = vmatprep.subr.mxu0 0.0
      %401 = vmatpush1.xpose.msra.mxu0 0.0
      %402 = vmatprep.subr.mxu0 0.0
      %403 = vmatpush1.xpose.msra.mxu0 0.0
      %404 = vmatprep.subr.mxu0 0.0
      %405 = vmatpush1.xpose.msra.mxu0 0.0
      %406 = vmatprep.subr.mxu0 0.0
      %407 = vmatpush1.xpose.msra.mxu0 0.0
      %408 = vmatprep.subr.mxu0 0.0
      %409 = vmatpush1.xpose.msra.mxu0 0.0
      %410 = vmatprep.subr.mxu0 0.0
      %411 = vmatpush1.xpose.msra.mxu0 0.0
      %412 = vmatprep.subr.mxu0 0.0
      %413 = vmatpush1.xpose.msra.mxu0 0.0
      %414 = vmatprep.subr.mxu0 0.0
      %415 = vmatpush1.xpose.msra.mxu0 0.0
      %416 = vmatprep.subr.mxu0 0.0
      %417 = vmatpush1.xpose.msra.mxu0 0.0
      %418 = vmatprep.subr.mxu0 0.0
      %419 = vmatpush1.xpose.msra.mxu0 0.0
      %420 = vmatprep.subr.mxu0 0.0
      %421 = vmatpush1.xpose.msra.mxu0 0.0
      %422 = vmatprep.subr.mxu0 0.0
      %423 = vmatpush1.xpose.msra.mxu0 0.0
      %424 = vmatprep.subr.mxu0 0.0
      %425 = vmatpush1.xpose.msra.mxu0 0.0
      %426 = vmatprep.subr.mxu0 0.0
      %427 = vmatpush1.xpose.msra.mxu0 0.0
      %428 = vmatprep.subr.mxu0 0.0
      %429 = vmatpush1.xpose.msra.mxu0 0.0
      %430 = vmatprep.subr.mxu0 0.0
      %431 = vmatpush1.xpose.msra.mxu0 0.0
      %432 = vmatprep.subr.mxu0 0.0
      %433 = vmatpush1.xpose.msra.mxu0 0.0
      %434 = vmatprep.subr.mxu0 0.0
      %435 = vmatpush1.xpose.msra.mxu0 0.0
      %436 = vmatprep.subr.mxu0 0.0
      %437 = vmatpush1.xpose.msra.mxu0 0.0
      %438 = vmatprep.subr.mxu0 0.0
      %439 = vmatpush1.xpose.msra.mxu0 0.0
      %440 = vmatprep.subr.mxu0 0.0
      %441 = vmatpush1.xpose.msra.mxu0 0.0
      %442 = vmatprep.subr.mxu0 0.0
      %443 = vmatpush1.xpose.msra.mxu0 0.0
      %444 = vmatprep.subr.mxu0 0.0
      %445 = vmatpush1.xpose.msra.mxu0 0.0
      %446 = vmatprep.subr.mxu0 0.0
      %447 = vmatpush1.xpose.msra.mxu0 0.0
      %448 = vmatprep.subr.mxu0 0.0
      %449 = vmatpush1.xpose.msra.mxu0 0.0
      %450 = vmatprep.subr.mxu0 0.0
      %451 = vmatpush1.xpose.msra.mxu0 0.0
      %452 = vmatprep.subr.mxu0 0.0
      %453 = vmatpush1.xpose.msra.mxu0 0.0
      %454 = vmatprep.subr.mxu0 0.0
      %455 = vmatpush1.xpose.msra.mxu0 0.0
      %456 = vmatprep.subr.mxu0 0.0
      %457 = vmatpush1.xpose.msra.mxu0 0.0
      %458 = vmatprep.subr.mxu0 0.0
      %459 = vmatpush1.xpose.msra.mxu0 0.0
      %460 = vmatprep.mubr.f32.mxu0 0.0
      %461 = vmatmul.mubr.f32.gmra.mrb[0].mxu0 %v324
      %v462 = vpop.f32.mrb[0].mxu0
      %v463 = vadd.f32 0.0, %v462
      %v464 = vpop.f32.mrb[0].mxu0
      %465 = vdwg.mxu0
      %vm466 = vcmask 64512
      %v467 = vsel %vm466, %v463, -inf
      %468 = vmax.xlane.f32.xlu0 %v467
      %v469 = vpop.xlane.xlu0 %468
      %v470 = vsub.f32 %v463, %v469
      %v471 = vmul.f32 %v470, 1.442695
      %v472 = vpow.pop %v471
      %v473 = vld [vmem:[%s2] sm:$0xff]
      %v474 = vmul.f32 %v472, %v473
      %v475 = vsel %vm466, %v474, 0.0
      %476 = vadd.xlane.f32.xlu0 %v475
      %v477 = vpop.xlane.xlu0 %476
      %478 = vxpose.xlu0.b32.start [1/16] %v393, 128
      %479 = vxpose.xlu0.b32.cont [2/16] 0.0, 128
      %480 = vxpose.xlu0.b32.cont [3/16] 0.0, 128
      %481 = vxpose.xlu0.b32.cont [4/16] 0.0, 128
      %482 = vxpose.xlu0.b32.cont [5/16] 0.0, 128
      %483 = vxpose.xlu0.b32.cont [6/16] 0.0, 128
      %484 = vxpose.xlu0.b32.cont [7/16] 0.0, 128
      %485 = vxpose.xlu0.b32.cont [8/16] 0.0, 128
      %486 = vxpose.xlu0.b32.cont [9/16] 0.0, 128
      %487 = vxpose.xlu0.b32.cont [10/16] 0.0, 128
      %488 = vxpose.xlu0.b32.cont [11/16] 0.0, 128
      %489 = vxpose.xlu0.b32.cont [12/16] 0.0, 128
      %490 = vxpose.xlu0.b32.cont [13/16] 0.0, 128
      %491 = vxpose.xlu0.b32.cont [14/16] 0.0, 128
      %492 = vxpose.xlu0.b32.cont [15/16] 0.0, 128
      %493 = vxpose.xlu0.b32.end [16/16] 0.0, 128
      %v494 = vpop.trf.xlu0
      %v495 = vpop.trf.xlu0
      %v496 = vpop.trf.xlu0
      %v497 = vpop.trf.xlu0
      %v498 = vpop.trf.xlu0
      %v499 = vpop.trf.xlu0
      %v500 = vpop.trf.xlu0
      %v501 = vpop.trf.xlu0
      %v502 = vpop.trf.xlu0
      %v503 = vpop.trf.xlu0
      %v504 = vpop.trf.xlu0
      %v505 = vpop.trf.xlu0
      %v506 = vpop.trf.xlu0
      %v507 = vpop.trf.xlu0
      %v508 = vpop.trf.xlu0
      %v509 = vpop.trf.xlu0
      %v511 = vsel %vm466, %v494, 0
      %v514 = vsel %vm466, %v495, 0
      %v517 = vsel %vm466, %v496, 0
      %v520 = vsel %vm466, %v497, 0
      %v523 = vsel %vm466, %v474, 0
      %525 = vmatprep.subr.mxu0 0.0
      %526 = vmatpush1.xpose.msra.mxu0 %v523
      %527 = vmatprep.subr.mxu0 0.0
      %528 = vmatpush1.xpose.msra.mxu0 0.0
      %529 = vmatprep.subr.mxu0 0.0
      %530 = vmatpush1.xpose.msra.mxu0 0.0
      %531 = vmatprep.subr.mxu0 0.0
      %532 = vmatpush1.xpose.msra.mxu0 0.0
      %533 = vmatprep.subr.mxu0 0.0
      %534 = vmatpush1.xpose.msra.mxu0 0.0
      %535 = vmatprep.subr.mxu0 0.0
      %536 = vmatpush1.xpose.msra.mxu0 0.0
      %537 = vmatprep.subr.mxu0 0.0
      %538 = vmatpush1.xpose.msra.mxu0 0.0
      %539 = vmatprep.subr.mxu0 0.0
      %540 = vmatpush1.xpose.msra.mxu0 0.0
      %541 = vmatprep.subr.mxu0 0.0
      %542 = vmatpush1.xpose.msra.mxu0 0.0
      %543 = vmatprep.subr.mxu0 0.0
      %544 = vmatpush1.xpose.msra.mxu0 0.0
      %545 = vmatprep.subr.mxu0 0.0
      %546 = vmatpush1.xpose.msra.mxu0 0.0
      %547 = vmatprep.subr.mxu0 0.0
      %548 = vmatpush1.xpose.msra.mxu0 0.0
      %549 = vmatprep.subr.mxu0 0.0
      %550 = vmatpush1.xpose.msra.mxu0 0.0
      %551 = vmatprep.subr.mxu0 0.0
      %552 = vmatpush1.xpose.msra.mxu0 0.0
      %553 = vmatprep.subr.mxu0 0.0
      %554 = vmatpush1.xpose.msra.mxu0 0.0
      %555 = vmatprep.subr.mxu0 0.0
      %556 = vmatpush1.xpose.msra.mxu0 0.0
      %557 = vmatprep.subr.mxu0 0.0
      %558 = vmatpush1.xpose.msra.mxu0 0.0
      %559 = vmatprep.subr.mxu0 0.0
      %560 = vmatpush1.xpose.msra.mxu0 0.0
      %561 = vmatprep.subr.mxu0 0.0
      %562 = vmatpush1.xpose.msra.mxu0 0.0
      %563 = vmatprep.subr.mxu0 0.0
      %564 = vmatpush1.xpose.msra.mxu0 0.0
      %565 = vmatprep.subr.mxu0 0.0
      %566 = vmatpush1.xpose.msra.mxu0 0.0
      %567 = vmatprep.subr.mxu0 0.0
      %568 = vmatpush1.xpose.msra.mxu0 0.0
      %569 = vmatprep.subr.mxu0 0.0
      %570 = vmatpush1.xpose.msra.mxu0 0.0
      %571 = vmatprep.subr.mxu0 0.0
      %572 = vmatpush1.xpose.msra.mxu0 0.0
      %573 = vmatprep.subr.mxu0 0.0
      %574 = vmatpush1.xpose.msra.mxu0 0.0
      %575 = vmatprep.subr.mxu0 0.0
      %576 = vmatpush1.xpose.msra.mxu0 0.0
      %577 = vmatprep.subr.mxu0 0.0
      %578 = vmatpush1.xpose.msra.mxu0 0.0
      %579 = vmatprep.subr.mxu0 0.0
      %580 = vmatpush1.xpose.msra.mxu0 0.0
      %581 = vmatprep.subr.mxu0 0.0
      %582 = vmatpush1.xpose.msra.mxu0 0.0
      %583 = vmatprep.subr.mxu0 0.0
      %584 = vmatpush1.xpose.msra.mxu0 0.0
      %585 = vmatprep.subr.mxu0 0.0
      %586 = vmatpush1.xpose.msra.mxu0 0.0
      %587 = vmatprep.subr.mxu0 0.0
      %588 = vmatpush1.xpose.msra.mxu0 0.0
      %589 = vmatprep.mubr.f32.mxu0 0.0
      %590 = vmatmul.mubr.f32.gmra.mrb[0].mxu0 %v511
      %v591 = vpop.f32.mrb[0].mxu0
      %v592 = vadd.f32 0.0, %v591
      %v593 = vpop.f32.mrb[0].mxu0
      %594 = vmatprep.mubr.f32.mxu0 0.0
      %595 = vmatmul.mubr.f32.gmra.mrb[0].mxu0 %v514
      %v596 = vpop.f32.mrb[0].mxu0
      %v597 = vadd.f32 0.0, %v596
      %v598 = vpop.f32.mrb[0].mxu0
      %599 = vmatprep.mubr.f32.mxu0 0.0
      %600 = vmatmul.mubr.f32.gmra.mrb[0].mxu0 %v517
      %v601 = vpop.f32.mrb[0].mxu0
      %v602 = vadd.f32 0.0, %v601
      %v603 = vpop.f32.mrb[0].mxu0
      %604 = vmatprep.mubr.f32.mxu0 0.0
      %605 = vmatmul.mubr.f32.gmra.mrb[0].mxu0 %v520
      %v606 = vpop.f32.mrb[0].mxu0
      %v607 = vadd.f32 0.0, %v606
      %v608 = vpop.f32.mrb[0].mxu0
      %609 = vdwg.mxu0
      %v610 = vrcp.pop %v477
      %v612 = vlaneseq
      %v613 = vand.u32 %v612, 127
      %v614 = vlaneseq
      %v615 = vshrl.u32 %v614, 7
      %v616 = vsub.s32 %v613, %v615
      %v617 = vrot.slane %v610, %v616
      %vm618 = vcmask 1042434
      %v619 = vsel %vm618, %v617, %v617
      %vm620 = vcmask 1043459
      %v621 = vsel %vm620, %v617, %v619
      %vm622 = vcmask 1044484
      %v623 = vsel %vm622, %v617, %v621
      %vm624 = vcmask 1045509
      %v625 = vsel %vm624, %v617, %v623
      %vm626 = vcmask 1046534
      %v627 = vsel %vm626, %v617, %v625
      %vm628 = vcmask 1047559
      %v629 = vsel %vm628, %v617, %v627
      %v631 = vmul.f32 %v592, %v629
      %v632 = vmul.f32 %v597, %v629
      %v633 = vmul.f32 %v602, %v629
      %v634 = vmul.f32 %v607, %v629
      %635 = vst.msk [vmem:[%s170] sm:$0xff] %vm466, %v631
      %636 = vst.msk [vmem:[%s170 + $0x8] sm:$0xff] %vm466, %v632
      %637 = vst.msk [vmem:[%s170 + $0x10] sm:$0xff] %vm466, %v633
      %638 = vst.msk [vmem:[%s170 + $0x18] sm:$0xff] %vm466, %v634
      %p639 = scmp.lt.s32.totalorder %s14, 1
      %s640 = scalar_select %p639, %s14, 1
      %s641 = smul.addr %s640, 4
      %s642 = smul.addr %s641, 8
      %s643 = scalar_lea.vmem %s3, %s642
      // Predicated region
      $region33: #{tpu_custom_call.1} parent=31 // pred_check
        %p644 = pneg %p100
      $region34: #{tpu_custom_call.1} parent=31 // pred_check_branch
        %646 = sbr.rel (%p644) target = $region36
      $region35: #{tpu_custom_call.1} parent=31 // pred_region
        _
      $region36: #{tpu_custom_call.1} parent=31 // pred_fallthru
        _
    $region32: #{tpu_custom_call.1} parent=5 // pred_fallthru
      _
    %p647 = scmp.le.s32.totalorder 2, %s9
    // Predicated region
    $region37: #{tpu_custom_call.1} parent=5 // pred_check
      %p648 = pneg %p647
    $region38: #{tpu_custom_call.1} parent=5 // pred_check_branch
      %650 = sbr.rel (%p648) target = $region40
    $region39: #{tpu_custom_call.1} parent=5 // pred_region
      %s651 = ssub.s32 %s9, 2
      // Predicated region
      $region41: #{tpu_custom_call.1} parent=39 // pred_check
        %p652 = pneg %p106
      $region42: #{tpu_custom_call.1} parent=39 // pred_check_branch
        %654 = sbr.rel (%p652) target = $region44
      $region43: #{tpu_custom_call.1} parent=39 // pred_region
        %p655 = scmp.lt.s32.totalorder %s15, 1
        %s656 = scalar_select %p655, %s15, 1
        %s657 = smul.addr %s656, 4
        %s658 = smul.addr %s657, 8
        %s659 = scalar_lea.vmem %s3, %s658
      $region44: #{tpu_custom_call.1} parent=39 // pred_fallthru
        _
    $region40: #{tpu_custom_call.1} parent=5 // pred_fallthru
      _
  $region6: #{tpu_custom_call.1} parent=0 // loop_footer
    %s13 = sadd.s32 1, %s9
  $region7: #{tpu_custom_call.1} parent=0 // loop_footer_branch
    %8 = sbr.rel target = $region3
  $region8: #{tpu_custom_call.1} parent=0 // loop_exit
    _

</llo_original>
